<compile_context>
chip_gen: v6e
topology: v6e:2x2x1
jax: 0.10.0
libtpu: 0.0.40
codegen_flags: <defaults>
</compile_context>

<pallas_src>
import jax
import jax.numpy as jnp
from jax.experimental import pallas as pl
from jax.experimental.pallas import tpu as pltpu


IN_FEATURES = 224
OUT_FEATURES = 448

# Init-time padded layout: exact MXU tiling (multiples of 128/256) and
# lane-dense (multiple-of-128) output stores.
K_PAD = 256   # 224 -> 256
N_PAD = 512   # 448 -> 512
M_MIN = 8     # fill all 8 sublanes of each x1 / output vreg


def _linear_add_kernel(x1_ref, w_ref, b_ref, x2_ref, o_ref):
    # Whole (padded) problem < 0.7 MiB: one MXU matmul with f32 accumulation,
    # then a fused bias broadcast + residual add on the VPU (kept in f32 so
    # the elementwise path is also valid on v5e, which has no bf16 VALU).
    acc = jnp.dot(x1_ref[...], w_ref[...], preferred_element_type=jnp.float32)
    o_ref[...] = (acc + b_ref[...] + x2_ref[...]).astype(o_ref.dtype)


def init_params(key):
    """Torch-style nn.Linear(224, 448) init + one-time padded layout prep."""
    k_w, k_b = jax.random.split(key)
    bound = 1.0 / (IN_FEATURES ** 0.5)
    w = jax.random.uniform(k_w, (OUT_FEATURES, IN_FEATURES), jnp.float32,
                           minval=-bound, maxval=bound)
    b = jax.random.uniform(k_b, (OUT_FEATURES,), jnp.float32,
                           minval=-bound, maxval=bound)
    # Hoisted out of the hot path: transpose to (K, N), zero-pad to (256, 512).
    w_t_pad = (jnp.zeros((K_PAD, N_PAD), jnp.float32)
               .at[:IN_FEATURES, :OUT_FEATURES].set(w.T))
    b_pad = jnp.zeros((1, N_PAD), jnp.float32).at[:, :OUT_FEATURES].set(b)
    return w, b, w_t_pad, b_pad


@jax.jit
def linear_add(x1, x2, w_t_pad, b_pad):
    """y = x1 @ W^T + b + x2 as a single fused, gridless Pallas call."""
    M, K = x1.shape
    assert K == IN_FEATURES, K
    assert x2.shape == (M, OUT_FEATURES), x2.shape
    assert w_t_pad.shape == (K_PAD, N_PAD) and b_pad.shape == (1, N_PAD)

    # Pad batch to a sublane multiple (>= 8); pad K / N to the prepared layout.
    # (Tiny jnp ops, fused by jit around the custom call.)
    mp = max(M_MIN, -(-M // 8) * 8)
    x1p = jnp.zeros((mp, K_PAD), jnp.float32).at[:M, :K].set(x1)
    x2p = jnp.zeros((mp, N_PAD), jnp.float32).at[:M, :OUT_FEATURES].set(x2)

    out_pad = pl.pallas_call(
        _linear_add_kernel,
        out_shape=jax.ShapeDtypeStruct((mp, N_PAD), jnp.float32),
        in_specs=[
            pl.BlockSpec(memory_space=pltpu.VMEM),   # x1   (mp, 256)
            pl.BlockSpec(memory_space=pltpu.VMEM),   # W^T  (256, 512)
            pl.BlockSpec(memory_space=pltpu.VMEM),   # bias (1, 512)
            pl.BlockSpec(memory_space=pltpu.VMEM),   # x2   (mp, 512)
        ],
        out_specs=pl.BlockSpec(memory_space=pltpu.VMEM),
    )(x1p, w_t_pad, b_pad, x2p)

    return out_pad[:M, :OUT_FEATURES]


if __name__ == "__main__":
    key = jax.random.PRNGKey(0)
    k_p, k_x1, k_x2 = jax.random.split(key, 3)
    w, b, w_t_pad, b_pad = init_params(k_p)

    M = 1
    x1 = jax.random.normal(k_x1, (M, IN_FEATURES), jnp.float32)    # (1, 224)
    x2 = jax.random.normal(k_x2, (M, OUT_FEATURES), jnp.float32)   # (1, 448)

    out = linear_add(x1, x2, w_t_pad, b_pad)
    jax.block_until_ready(out)
    assert out.shape == (M, OUT_FEATURES), out.shape

    # Reference: full-f32 Linear + residual (same semantics as the PyTorch model).
    ref = x1 @ w.T + b.reshape(1, -1) + x2
    max_err = float(jnp.max(jnp.abs(out - ref)))
    assert jnp.allclose(out, ref, atol=2e-2, rtol=2e-2), max_err

    print("KERNEL_OK")
</pallas_src>

<mosaic_0001>
module attributes {stable_mosaic.version = 11 : i64} {
  func.func @_linear_add_kernel(%arg0: memref<8x256xf32, #tpu.memory_space<vmem>>, %arg1: memref<256x512xf32, #tpu.memory_space<vmem>>, %arg2: memref<1x512xf32, #tpu.memory_space<vmem>>, %arg3: memref<8x512xf32, #tpu.memory_space<vmem>>, %arg4: memref<8x512xf32, #tpu.memory_space<vmem>>) attributes {dimension_semantics = [], scalar_prefetch = 0 : i64, scratch_operands = 0 : i64, tpu.core_type = #tpu.core_type<tc>} {
    %c0 = arith.constant 0 : index
    %c0_0 = arith.constant 0 : index
    %0 = vector.load %arg0[%c0, %c0_0] : memref<8x256xf32, #tpu.memory_space<vmem>>, vector<8x256xf32>
    %c0_1 = arith.constant 0 : index
    %c0_2 = arith.constant 0 : index
    %1 = vector.load %arg1[%c0_1, %c0_2] : memref<256x512xf32, #tpu.memory_space<vmem>>, vector<256x512xf32>
    %cst = arith.constant dense<0.000000e+00> : vector<8x512xf32>
    %2 = tpu.matmul %0, %1, %cst {dimension_numbers = #tpu.dot_dimension_numbers<[1], [0], [0], [1], [0, 0, 1, 1], [], []>} : vector<8x256xf32>, vector<256x512xf32>, vector<8x512xf32> -> vector<8x512xf32>
    %c0_3 = arith.constant 0 : index
    %c0_4 = arith.constant 0 : index
    %3 = vector.load %arg2[%c0_3, %c0_4] : memref<1x512xf32, #tpu.memory_space<vmem>>, vector<1x512xf32>
    %4 = vector.broadcast %3 : vector<1x512xf32> to vector<8x512xf32>
    %5 = arith.addf %2, %4 : vector<8x512xf32>
    %c0_5 = arith.constant 0 : index
    %c0_6 = arith.constant 0 : index
    %6 = vector.load %arg3[%c0_5, %c0_6] : memref<8x512xf32, #tpu.memory_space<vmem>>, vector<8x512xf32>
    %7 = arith.addf %5, %6 : vector<8x512xf32>
    %c0_7 = arith.constant 0 : index
    %c0_8 = arith.constant 0 : index
    %8 = vector.load %arg4[%c0_7, %c0_8] : memref<8x512xf32, #tpu.memory_space<vmem>>, vector<8x512xf32>
    tpu.vector_store %arg4[%c0_7, %c0_8], %7 {strides = array<i32>} : memref<8x512xf32, #tpu.memory_space<vmem>>, vector<8x512xf32>,
    return
  }
}

</mosaic_0001>

<llo_original>
// kernel: linear_add.1
$region0: #{linear_add.1}
  #allocation0 [shape = 'u32[]', space=smem, size = 0x4, offset = 0x4, fixed_abs, tag = 'smem constant byte address 0x4 - core index']
  #allocation1 [shape = 'u32[144,128]{1,0:T(1,128)}', space=vmem, size = 0x12000, scoped, tag = 'internal scratch']
  %s0 = inlined_call_operand.vmem [shape: f32[8,256], index: 0, kind: input, shape index: {}]
  %s1 = inlined_call_operand.hbm [shape: f32[256,512], index: 1, kind: input, shape index: {}]
  %s2 = inlined_call_operand.vmem [shape: f32[1,512], index: 2, kind: input, shape index: {}]
  %s3 = inlined_call_operand.vmem [shape: f32[8,512], index: 3, kind: input, shape index: {}]
  %s4 = inlined_call_operand.vmem [shape: f32[8,512], index: 4, kind: output, shape index: {}]
  %s5 = sld [smem:[#allocation0]]
  $region30: #{linear_add.1} parent=0
    _
  %s7 = ssub.s32 1, %s5
  %s8 = scalar_select 0, %s7, %s5
  $region1: #{linear_add.1} parent=0
    #allocation2 [shape = 'u8[524288]{0}', space=vmem, size = 0x80000, scoped, tag = 'input window, operand 1, single buffered']
    #allocation3 [shape = 's32[1]{0}', space=sflag, size = 0x4, scoped, tag = 'scoped memory for linear_add.1']
    %9 = vsyncpa [#allocation3], 0
    // Predicated region
    $region2: #{linear_add.1} parent=1 // pred_check
      _
    $region3: #{linear_add.1} parent=1 // pred_check_branch
      %11 = sbr.rel (0) target = $region5
    $region4: #{linear_add.1} parent=1 // pred_region
      _
    $region5: #{linear_add.1} parent=1 // pred_fallthru
      _
    // Predicated region
    $region6: #{linear_add.1} parent=1 // pred_check
      _
    $region7: #{linear_add.1} parent=1 // pred_check_branch
      %13 = sbr.rel (0) target = $region9
    $region8: #{linear_add.1} parent=1 // pred_region
      %s15 = ssub.s32 16384, 16384
      %16 = vsyncadd [#allocation3], %s15
      %s17 = sshll.u32 [#allocation2], 4
      %s18 = int_to_ptr.vmem [resolvable:$true] %s17
      %23 = dma.hbm_to_vmem [thread:$0]  %s1, 16384, %s18, [#allocation3], 512, 512, 32
    $region9: #{linear_add.1} parent=1 // pred_fallthru
      _
    // Predicated region
    $region10: #{linear_add.1} parent=1 // pred_check
      _
    $region11: #{linear_add.1} parent=1 // pred_check_branch
      %25 = sbr.rel (0) target = $region13
    $region12: #{linear_add.1} parent=1 // pred_region
      _
    $region13: #{linear_add.1} parent=1 // pred_fallthru
      _
    // Predicated region
    $region14: #{linear_add.1} parent=1 // pred_check
      _
    $region15: #{linear_add.1} parent=1 // pred_check_branch
      %27 = sbr.rel (0) target = $region17
    $region16: #{linear_add.1} parent=1 // pred_region
      _
    $region17: #{linear_add.1} parent=1 // pred_fallthru
      _
    // Predicated region
    $region18: #{linear_add.1} parent=1 // pred_check
      _
    $region19: #{linear_add.1} parent=1 // pred_check_branch
      %29 = sbr.rel (0) target = $region21
    $region20: #{linear_add.1} parent=1 // pred_region
      %30 = dma.done [#allocation3], 16384
    $region21: #{linear_add.1} parent=1 // pred_fallthru
      _
    %v31 = vld [vmem:[%s0] sm:$0xff]
    %v32 = vld [vmem:[%s0 + $0x8] sm:$0xff]
    %v33 = vld [vmem:[#allocation2] sm:$0xff]
    %v34 = vld [vmem:[#allocation2 + $0x8] sm:$0xff]
    %v35 = vld [vmem:[#allocation2 + $0x10] sm:$0xff]
    %v36 = vld [vmem:[#allocation2 + $0x18] sm:$0xff]
    %v37 = vld [vmem:[#allocation2 + $0x20] sm:$0xff]
    %v38 = vld [vmem:[#allocation2 + $0x28] sm:$0xff]
    %v39 = vld [vmem:[#allocation2 + $0x30] sm:$0xff]
    %v40 = vld [vmem:[#allocation2 + $0x38] sm:$0xff]
    %v41 = vld [vmem:[#allocation2 + $0x40] sm:$0xff]
    %v42 = vld [vmem:[#allocation2 + $0x48] sm:$0xff]
    %v43 = vld [vmem:[#allocation2 + $0x50] sm:$0xff]
    %v44 = vld [vmem:[#allocation2 + $0x58] sm:$0xff]
    %v45 = vld [vmem:[#allocation2 + $0x60] sm:$0xff]
    %v46 = vld [vmem:[#allocation2 + $0x68] sm:$0xff]
    %v47 = vld [vmem:[#allocation2 + $0x70] sm:$0xff]
    %v48 = vld [vmem:[#allocation2 + $0x78] sm:$0xff]
    %v49 = vld [vmem:[#allocation2 + $0x80] sm:$0xff]
    %v50 = vld [vmem:[#allocation2 + $0x88] sm:$0xff]
    %v51 = vld [vmem:[#allocation2 + $0x90] sm:$0xff]
    %v52 = vld [vmem:[#allocation2 + $0x98] sm:$0xff]
    %v53 = vld [vmem:[#allocation2 + $0xa0] sm:$0xff]
    %v54 = vld [vmem:[#allocation2 + $0xa8] sm:$0xff]
    %v55 = vld [vmem:[#allocation2 + $0xb0] sm:$0xff]
    %v56 = vld [vmem:[#allocation2 + $0xb8] sm:$0xff]
    %v57 = vld [vmem:[#allocation2 + $0xc0] sm:$0xff]
    %v58 = vld [vmem:[#allocation2 + $0xc8] sm:$0xff]
    %v59 = vld [vmem:[#allocation2 + $0xd0] sm:$0xff]
    %v60 = vld [vmem:[#allocation2 + $0xd8] sm:$0xff]
    %v61 = vld [vmem:[#allocation2 + $0xe0] sm:$0xff]
    %v62 = vld [vmem:[#allocation2 + $0xe8] sm:$0xff]
    %v63 = vld [vmem:[#allocation2 + $0xf0] sm:$0xff]
    %v64 = vld [vmem:[#allocation2 + $0xf8] sm:$0xff]
    %v65 = vld [vmem:[#allocation2 + $0x100] sm:$0xff]
    %v66 = vld [vmem:[#allocation2 + $0x108] sm:$0xff]
    %v67 = vld [vmem:[#allocation2 + $0x110] sm:$0xff]
    %v68 = vld [vmem:[#allocation2 + $0x118] sm:$0xff]
    %v69 = vld [vmem:[#allocation2 + $0x120] sm:$0xff]
    %v70 = vld [vmem:[#allocation2 + $0x128] sm:$0xff]
    %v71 = vld [vmem:[#allocation2 + $0x130] sm:$0xff]
    %v72 = vld [vmem:[#allocation2 + $0x138] sm:$0xff]
    %v73 = vld [vmem:[#allocation2 + $0x140] sm:$0xff]
    %v74 = vld [vmem:[#allocation2 + $0x148] sm:$0xff]
    %v75 = vld [vmem:[#allocation2 + $0x150] sm:$0xff]
    %v76 = vld [vmem:[#allocation2 + $0x158] sm:$0xff]
    %v77 = vld [vmem:[#allocation2 + $0x160] sm:$0xff]
    %v78 = vld [vmem:[#allocation2 + $0x168] sm:$0xff]
    %v79 = vld [vmem:[#allocation2 + $0x170] sm:$0xff]
    %v80 = vld [vmem:[#allocation2 + $0x178] sm:$0xff]
    %v81 = vld [vmem:[#allocation2 + $0x180] sm:$0xff]
    %v82 = vld [vmem:[#allocation2 + $0x188] sm:$0xff]
    %v83 = vld [vmem:[#allocation2 + $0x190] sm:$0xff]
    %v84 = vld [vmem:[#allocation2 + $0x198] sm:$0xff]
    %v85 = vld [vmem:[#allocation2 + $0x1a0] sm:$0xff]
    %v86 = vld [vmem:[#allocation2 + $0x1a8] sm:$0xff]
    %v87 = vld [vmem:[#allocation2 + $0x1b0] sm:$0xff]
    %v88 = vld [vmem:[#allocation2 + $0x1b8] sm:$0xff]
    %v89 = vld [vmem:[#allocation2 + $0x1c0] sm:$0xff]
    %v90 = vld [vmem:[#allocation2 + $0x1c8] sm:$0xff]
    %v91 = vld [vmem:[#allocation2 + $0x1d0] sm:$0xff]
    %v92 = vld [vmem:[#allocation2 + $0x1d8] sm:$0xff]
    %v93 = vld [vmem:[#allocation2 + $0x1e0] sm:$0xff]
    %v94 = vld [vmem:[#allocation2 + $0x1e8] sm:$0xff]
    %v95 = vld [vmem:[#allocation2 + $0x1f0] sm:$0xff]
    %v96 = vld [vmem:[#allocation2 + $0x1f8] sm:$0xff]
    %v97 = vld [vmem:[#allocation2 + $0x200] sm:$0xff]
    %v98 = vld [vmem:[#allocation2 + $0x208] sm:$0xff]
    %v99 = vld [vmem:[#allocation2 + $0x210] sm:$0xff]
    %v100 = vld [vmem:[#allocation2 + $0x218] sm:$0xff]
    %v101 = vld [vmem:[#allocation2 + $0x220] sm:$0xff]
    %v102 = vld [vmem:[#allocation2 + $0x228] sm:$0xff]
    %v103 = vld [vmem:[#allocation2 + $0x230] sm:$0xff]
    %v104 = vld [vmem:[#allocation2 + $0x238] sm:$0xff]
    %v105 = vld [vmem:[#allocation2 + $0x240] sm:$0xff]
    %v106 = vld [vmem:[#allocation2 + $0x248] sm:$0xff]
    %v107 = vld [vmem:[#allocation2 + $0x250] sm:$0xff]
    %v108 = vld [vmem:[#allocation2 + $0x258] sm:$0xff]
    %v109 = vld [vmem:[#allocation2 + $0x260] sm:$0xff]
    %v110 = vld [vmem:[#allocation2 + $0x268] sm:$0xff]
    %v111 = vld [vmem:[#allocation2 + $0x270] sm:$0xff]
    %v112 = vld [vmem:[#allocation2 + $0x278] sm:$0xff]
    %v113 = vld [vmem:[#allocation2 + $0x280] sm:$0xff]
    %v114 = vld [vmem:[#allocation2 + $0x288] sm:$0xff]
    %v115 = vld [vmem:[#allocation2 + $0x290] sm:$0xff]
    %v116 = vld [vmem:[#allocation2 + $0x298] sm:$0xff]
    %v117 = vld [vmem:[#allocation2 + $0x2a0] sm:$0xff]
    %v118 = vld [vmem:[#allocation2 + $0x2a8] sm:$0xff]
    %v119 = vld [vmem:[#allocation2 + $0x2b0] sm:$0xff]
    %v120 = vld [vmem:[#allocation2 + $0x2b8] sm:$0xff]
    %v121 = vld [vmem:[#allocation2 + $0x2c0] sm:$0xff]
    %v122 = vld [vmem:[#allocation2 + $0x2c8] sm:$0xff]
    %v123 = vld [vmem:[#allocation2 + $0x2d0] sm:$0xff]
    %v124 = vld [vmem:[#allocation2 + $0x2d8] sm:$0xff]
    %v125 = vld [vmem:[#allocation2 + $0x2e0] sm:$0xff]
    %v126 = vld [vmem:[#allocation2 + $0x2e8] sm:$0xff]
    %v127 = vld [vmem:[#allocation2 + $0x2f0] sm:$0xff]
    %v128 = vld [vmem:[#allocation2 + $0x2f8] sm:$0xff]
    %v129 = vld [vmem:[#allocation2 + $0x300] sm:$0xff]
    %v130 = vld [vmem:[#allocation2 + $0x308] sm:$0xff]
    %v131 = vld [vmem:[#allocation2 + $0x310] sm:$0xff]
    %v132 = vld [vmem:[#allocation2 + $0x318] sm:$0xff]
    %v133 = vld [vmem:[#allocation2 + $0x320] sm:$0xff]
    %v134 = vld [vmem:[#allocation2 + $0x328] sm:$0xff]
    %v135 = vld [vmem:[#allocation2 + $0x330] sm:$0xff]
    %v136 = vld [vmem:[#allocation2 + $0x338] sm:$0xff]
    %v137 = vld [vmem:[#allocation2 + $0x340] sm:$0xff]
    %v138 = vld [vmem:[#allocation2 + $0x348] sm:$0xff]
    %v139 = vld [vmem:[#allocation2 + $0x350] sm:$0xff]
    %v140 = vld [vmem:[#allocation2 + $0x358] sm:$0xff]
    %v141 = vld [vmem:[#allocation2 + $0x360] sm:$0xff]
    %v142 = vld [vmem:[#allocation2 + $0x368] sm:$0xff]
    %v143 = vld [vmem:[#allocation2 + $0x370] sm:$0xff]
    %v144 = vld [vmem:[#allocation2 + $0x378] sm:$0xff]
    %v145 = vld [vmem:[#allocation2 + $0x380] sm:$0xff]
    %v146 = vld [vmem:[#allocation2 + $0x388] sm:$0xff]
    %v147 = vld [vmem:[#allocation2 + $0x390] sm:$0xff]
    %v148 = vld [vmem:[#allocation2 + $0x398] sm:$0xff]
    %v149 = vld [vmem:[#allocation2 + $0x3a0] sm:$0xff]
    %v150 = vld [vmem:[#allocation2 + $0x3a8] sm:$0xff]
    %v151 = vld [vmem:[#allocation2 + $0x3b0] sm:$0xff]
    %v152 = vld [vmem:[#allocation2 + $0x3b8] sm:$0xff]
    %v153 = vld [vmem:[#allocation2 + $0x3c0] sm:$0xff]
    %v154 = vld [vmem:[#allocation2 + $0x3c8] sm:$0xff]
    %v155 = vld [vmem:[#allocation2 + $0x3d0] sm:$0xff]
    %v156 = vld [vmem:[#allocation2 + $0x3d8] sm:$0xff]
    %v157 = vld [vmem:[#allocation2 + $0x3e0] sm:$0xff]
    %v158 = vld [vmem:[#allocation2 + $0x3e8] sm:$0xff]
    %v159 = vld [vmem:[#allocation2 + $0x3f0] sm:$0xff]
    %v160 = vld [vmem:[#allocation2 + $0x3f8] sm:$0xff]
    %v161 = vld [vmem:[%s2] sm:$0xf]
    %v163 = vlaneseq
    %v164 = vshrl.u32 %v163, 7
    %v165 = vsub.s32 0, %v164
    %v166 = vrot.slane %v161, %v165
    %v167 = vlaneseq
    %v168 = vshrl.u32 %v167, 7
    %v169 = vsub.s32 1, %v168
    %v170 = vrot.slane %v161, %v169
    %v171 = vlaneseq
    %v172 = vshrl.u32 %v171, 7
    %v173 = vsub.s32 2, %v172
    %v174 = vrot.slane %v161, %v173
    %v175 = vlaneseq
    %v176 = vshrl.u32 %v175, 7
    %v177 = vsub.s32 3, %v176
    %v178 = vrot.slane %v161, %v177
    %183 = vmatprep.subr.mxu0 %v94
    %184 = vmatpush1.msra.mxu0 %v93
    %185 = vmatprep.subr.mxu0 %v90
    %186 = vmatpush1.msra.mxu0 %v89
    %187 = vmatprep.subr.mxu0 %v86
    %188 = vmatpush1.msra.mxu0 %v85
    %189 = vmatprep.subr.mxu0 %v82
    %190 = vmatpush1.msra.mxu0 %v81
    %191 = vmatprep.subr.mxu0 %v78
    %192 = vmatpush1.msra.mxu0 %v77
    %193 = vmatprep.subr.mxu0 %v74
    %194 = vmatpush1.msra.mxu0 %v73
    %195 = vmatprep.subr.mxu0 %v70
    %196 = vmatpush1.msra.mxu0 %v69
    %197 = vmatprep.subr.mxu0 %v66
    %198 = vmatpush1.msra.mxu0 %v65
    %199 = vmatprep.subr.mxu0 %v62
    %200 = vmatpush1.msra.mxu0 %v61
    %201 = vmatprep.subr.mxu0 %v58
    %202 = vmatpush1.msra.mxu0 %v57
    %203 = vmatprep.subr.mxu0 %v54
    %204 = vmatpush1.msra.mxu0 %v53
    %205 = vmatprep.subr.mxu0 %v50
    %206 = vmatpush1.msra.mxu0 %v49
    %207 = vmatprep.subr.mxu0 %v46
    %208 = vmatpush1.msra.mxu0 %v45
    %209 = vmatprep.subr.mxu0 %v42
    %210 = vmatpush1.msra.mxu0 %v41
    %211 = vmatprep.subr.mxu0 %v38
    %212 = vmatpush1.msra.mxu0 %v37
    %213 = vmatprep.subr.mxu0 %v34
    %214 = vmatpush1.msra.mxu0 %v33
    %215 = vmatprep.subr.mxu0 %v158
    %216 = vmatpush2.msra.mxu0 %v157
    %217 = vmatprep.subr.mxu0 %v154
    %218 = vmatpush2.msra.mxu0 %v153
    %219 = vmatprep.subr.mxu0 %v150
    %220 = vmatpush2.msra.mxu0 %v149
    %221 = vmatprep.subr.mxu0 %v146
    %222 = vmatpush2.msra.mxu0 %v145
    %223 = vmatprep.subr.mxu0 %v142
    %224 = vmatpush2.msra.mxu0 %v141
    %225 = vmatprep.subr.mxu0 %v138
    %226 = vmatpush2.msra.mxu0 %v137
    %227 = vmatprep.subr.mxu0 %v134
    %228 = vmatpush2.msra.mxu0 %v133
    %229 = vmatprep.subr.mxu0 %v130
    %230 = vmatpush2.msra.mxu0 %v129
    %231 = vmatprep.subr.mxu0 %v126
    %232 = vmatpush2.msra.mxu0 %v125
    %233 = vmatprep.subr.mxu0 %v122
    %234 = vmatpush2.msra.mxu0 %v121
    %235 = vmatprep.subr.mxu0 %v118
    %236 = vmatpush2.msra.mxu0 %v117
    %237 = vmatprep.subr.mxu0 %v114
    %238 = vmatpush2.msra.mxu0 %v113
    %239 = vmatprep.subr.mxu0 %v110
    %240 = vmatpush2.msra.mxu0 %v109
    %241 = vmatprep.subr.mxu0 %v106
    %242 = vmatpush2.msra.mxu0 %v105
    %243 = vmatprep.subr.mxu0 %v102
    %244 = vmatpush2.msra.mxu0 %v101
    %245 = vmatprep.subr.mxu0 %v98
    %246 = vmatpush2.msra.mxu0 %v97
    %247 = vmatprep.mubr.f32.mxu0 %v32
    %248 = vmatmul.mubr.f32.gmra.mxu0 %v31
    %v249 = vpop.f32.mrf.mxu0
    %v250 = vadd.f32 %v166, %v249
    %v251 = vpop.f32.mrf.mxu0
    %v252 = vadd.f32 %v170, %v251
    %253 = vdwg.mxu0
    %254 = vmatprep.subr.mxu0 %v96
    %255 = vmatpush1.msra.mxu0 %v95
    %256 = vmatprep.subr.mxu0 %v92
    %257 = vmatpush1.msra.mxu0 %v91
    %258 = vmatprep.subr.mxu0 %v88
    %259 = vmatpush1.msra.mxu0 %v87
    %260 = vmatprep.subr.mxu0 %v84
    %261 = vmatpush1.msra.mxu0 %v83
    %262 = vmatprep.subr.mxu0 %v80
    %263 = vmatpush1.msra.mxu0 %v79
    %264 = vmatprep.subr.mxu0 %v76
    %265 = vmatpush1.msra.mxu0 %v75
    %266 = vmatprep.subr.mxu0 %v72
    %267 = vmatpush1.msra.mxu0 %v71
    %268 = vmatprep.subr.mxu0 %v68
    %269 = vmatpush1.msra.mxu0 %v67
    %270 = vmatprep.subr.mxu0 %v64
    %271 = vmatpush1.msra.mxu0 %v63
    %272 = vmatprep.subr.mxu0 %v60
    %273 = vmatpush1.msra.mxu0 %v59
    %274 = vmatprep.subr.mxu0 %v56
    %275 = vmatpush1.msra.mxu0 %v55
    %276 = vmatprep.subr.mxu0 %v52
    %277 = vmatpush1.msra.mxu0 %v51
    %278 = vmatprep.subr.mxu0 %v48
    %279 = vmatpush1.msra.mxu0 %v47
    %280 = vmatprep.subr.mxu0 %v44
    %281 = vmatpush1.msra.mxu0 %v43
    %282 = vmatprep.subr.mxu0 %v40
    %283 = vmatpush1.msra.mxu0 %v39
    %284 = vmatprep.subr.mxu0 %v36
    %285 = vmatpush1.msra.mxu0 %v35
    %286 = vmatprep.subr.mxu0 %v160
    %287 = vmatpush2.msra.mxu0 %v159
    %288 = vmatprep.subr.mxu0 %v156
    %289 = vmatpush2.msra.mxu0 %v155
    %290 = vmatprep.subr.mxu0 %v152
    %291 = vmatpush2.msra.mxu0 %v151
    %292 = vmatprep.subr.mxu0 %v148
    %293 = vmatpush2.msra.mxu0 %v147
    %294 = vmatprep.subr.mxu0 %v144
    %295 = vmatpush2.msra.mxu0 %v143
    %296 = vmatprep.subr.mxu0 %v140
    %297 = vmatpush2.msra.mxu0 %v139
    %298 = vmatprep.subr.mxu0 %v136
    %299 = vmatpush2.msra.mxu0 %v135
    %300 = vmatprep.subr.mxu0 %v132
    %301 = vmatpush2.msra.mxu0 %v131
    %302 = vmatprep.subr.mxu0 %v128
    %303 = vmatpush2.msra.mxu0 %v127
    %304 = vmatprep.subr.mxu0 %v124
    %305 = vmatpush2.msra.mxu0 %v123
    %306 = vmatprep.subr.mxu0 %v120
    %307 = vmatpush2.msra.mxu0 %v119
    %308 = vmatprep.subr.mxu0 %v116
    %309 = vmatpush2.msra.mxu0 %v115
    %310 = vmatprep.subr.mxu0 %v112
    %311 = vmatpush2.msra.mxu0 %v111
    %312 = vmatprep.subr.mxu0 %v108
    %313 = vmatpush2.msra.mxu0 %v107
    %314 = vmatprep.subr.mxu0 %v104
    %315 = vmatpush2.msra.mxu0 %v103
    %316 = vmatprep.subr.mxu0 %v100
    %317 = vmatpush2.msra.mxu0 %v99
    %318 = vmatprep.mubr.f32.mxu0 %v32
    %319 = vmatmul.mubr.f32.gmra.mxu0 %v31
    %v320 = vpop.f32.mrf.mxu0
    %v321 = vadd.f32 %v174, %v320
    %v322 = vpop.f32.mrf.mxu0
    %v323 = vadd.f32 %v178, %v322
    %324 = vdwg.mxu0
    %v325 = vld [vmem:[%s3] sm:$0xff]
    %v326 = vld [vmem:[%s3 + $0x8] sm:$0xff]
    %v327 = vld [vmem:[%s3 + $0x10] sm:$0xff]
    %v328 = vld [vmem:[%s3 + $0x18] sm:$0xff]
    %v329 = vadd.f32 %v250, %v325
    %v330 = vadd.f32 %v252, %v326
    %v331 = vadd.f32 %v321, %v327
    %v332 = vadd.f32 %v323, %v328
    %333 = vst [vmem:[%s4] sm:$0xff] %v329
    %334 = vst [vmem:[%s4 + $0x8] sm:$0xff] %v330
    %335 = vst [vmem:[%s4 + $0x10] sm:$0xff] %v331
    %336 = vst [vmem:[%s4 + $0x18] sm:$0xff] %v332
    // Predicated region
    $region22: #{linear_add.1} parent=1 // pred_check
      _
    $region23: #{linear_add.1} parent=1 // pred_check_branch
      %338 = sbr.rel (0) target = $region25
    $region24: #{linear_add.1} parent=1 // pred_region
      _
    $region25: #{linear_add.1} parent=1 // pred_fallthru
      _
    // Predicated region
    $region26: #{linear_add.1} parent=1 // pred_check
      _
    $region27: #{linear_add.1} parent=1 // pred_check_branch
      %340 = sbr.rel (0) target = $region29
    $region28: #{linear_add.1} parent=1 // pred_region
      _
    $region29: #{linear_add.1} parent=1 // pred_fallthru
      _
    %341 = vsyncpa [#allocation3], 1

</llo_original>
